<compile_context>
chip_gen: v7x
topology: tpu7x:2x2x1
jax: 0.10.0
libtpu: 0.0.40
codegen_flags: <defaults>
</compile_context>

<pallas_src>
import functools

import jax
import jax.numpy as jnp
from jax import lax
from jax.experimental import pallas as pl
from jax.experimental.pallas import tpu as pltpu


# Fused 1x1-head weight layout: every head starts on a sublane (8-row) boundary
# so per-head output slices / HBM stores are sublane-aligned.
_HEAD_ROW = {"p": 0, "xyzph": 8, "xyzphs": 16, "bg": 24}
_W2_ROWS = 32


# ----------------------------- fused Pallas kernel -----------------------------

def _outnet_kernel(x_ref, w1_ref, b1_ref, w2_ref, b2_ref,
                   p_ref, xyzph_ref, xyzphs_ref, bg_ref,
                   col_ref, *, H, W, C, TB):
    """Fused Outnet forward for TB images (channels-first, spatially flattened).

    x_ref      : (TB, C, H*W)   input images, lanes = flattened (h, w)
    w1_ref     : (4C, 9C)       all four 3x3 convs (rows = hidden channels)
    b1_ref     : (4C, 1)
    w2_ref     : (32, 4C)       block-diagonal fused 1x1 heads (rows 0/8/16/24)
    b2_ref     : (32, 1)
    p_ref      : (TB, 1, H*W)   per-branch outputs, already channels-first
    xyzph_ref  : (TB, 4, H*W)
    xyzphs_ref : (TB, 4, H*W)
    bg_ref     : (TB, 1, H*W)
    col_ref    : (9C, TB*H*W)   scratch: transposed im2col matrix
    """
    HW = H * W

    # (1, HW) boundary masks; broadcast over channels inside jnp.where.
    lane = lax.broadcasted_iota(jnp.int32, (1, HW), 1)
    if W & (W - 1) == 0:
        wcol = jnp.bitwise_and(lane, W - 1)
        hrow = jnp.right_shift(lane, W.bit_length() - 1)
    else:
        wcol = lane % W
        hrow = lane // W
    not_left = wcol != 0          # a kw==0 tap reads column w-1
    not_right = wcol != W - 1     # a kw==2 tap reads column w+1
    not_top = hrow != 0           # a kh==0 tap reads row h-1
    not_bot = hrow != H - 1       # a kh==2 tap reads row h+1

    taps = []
    for kh in range(3):
        for kw in range(3):
            m = None
            if kh == 0:
                m = not_top
            elif kh == 2:
                m = not_bot
            if kw == 0:
                m = not_left if m is None else jnp.logical_and(m, not_left)
            elif kw == 2:
                m = not_right if m is None else jnp.logical_and(m, not_right)
            taps.append(((kh - 1) * W + (kw - 1), m))

    # Transposed im2col via XLU lane rotations + boundary masks:
    #   col[t*C + ci, b*HW + h*W + w] = x[b, ci, h+kh-1, w+kw-1]   (0 off-image)
    # pltpu.roll == jnp.roll, so result[l] = x[l + s] needs shift = (-s) % HW;
    # every wrapped/out-of-image lane is covered by the masks.  All col stores
    # are sublane/lane aligned; no padded scratch, no unaligned loads.
    for b in range(TB):
        xb = x_ref[b, :, :]                                        # (C, HW)
        for t, (s, m) in enumerate(taps):
            v = xb if s == 0 else pltpu.roll(xb, (-s) % HW, 1)
            if m is not None:
                v = jnp.where(m, v, 0.0)
            col_ref[t * C:(t + 1) * C, b * HW:(b + 1) * HW] = v

    # Fused 3x3 conv of all four branches: one (4C, 9C) @ (9C, TB*HW) matmul.
    hidden = jnp.dot(w1_ref[...], col_ref[...],
                     preferred_element_type=jnp.float32) + b1_ref[...]
    # ELU(alpha=1); clamping keeps the discarded negative branch finite
    # (exp(min(x,0))-1 vs expm1: <1e-7 abs difference, well inside tolerance).
    act = jnp.where(hidden > 0.0, hidden,
                    jnp.exp(jnp.minimum(hidden, 0.0)) - 1.0)

    # Fused block-diagonal 1x1 heads: (32, 4C) @ (4C, TB*HW).
    out = jnp.dot(w2_ref[...], act, preferred_element_type=jnp.float32) + b2_ref[...]

    # Per-branch, per-image lane-dense stores: only the 10 real channels hit HBM.
    for b in range(TB):
        cols = slice(b * HW, (b + 1) * HW)
        p_ref[b, :, :] = out[0:1, cols]
        xyzph_ref[b, :, :] = out[8:12, cols]
        xyzphs_ref[b, :, :] = out[16:20, cols]
        bg_ref[b, :, :] = out[24:25, cols]


# ----------------------------- forward wrapper ---------------------------------

def _choose_tb(B, C, HW):
    """Images per grid step.

    Amortize the ~0.35 us per-step overhead with TB > 1, but (a) keep the col
    scratch (9C * TB*HW * 4 B) small — v7x has only 64 MiB physical VMEM, (b)
    bound the static unroll, and (c) keep >= 2 grid steps when possible so the
    'parallel' axis can use both v7x TensorCores.
    """
    cap = max(1, min(8, (4 << 20) // (9 * C * HW * 4)))
    divs = [d for d in range(1, B + 1) if B % d == 0 and d <= cap]
    multi = [d for d in divs if B // d >= 2]
    return max(multi) if multi else max(divs)


def outnet_forward(packed, x_nchw):
    """Outnet forward. x is NCHW; returns (p, xyzph, xyzphs, bg) in NCHW."""
    B, C, H, W = x_nchw.shape
    HW = H * W
    C4, K9 = 4 * C, 9 * C
    TB = _choose_tb(B, C, HW)
    grid = (B // TB,)

    x_flat = x_nchw.reshape(B, C, HW)          # free reshape, no transpose needed
    kernel = functools.partial(_outnet_kernel, H=H, W=W, C=C, TB=TB)

    p, xyzph, xyzphs, bg = pl.pallas_call(
        kernel,
        grid=grid,                             # TB images per step; parallel on v7x
        in_specs=[
            pl.BlockSpec((TB, C, HW), lambda b: (b, 0, 0)),
            pl.BlockSpec((C4, K9), lambda b: (0, 0)),
            pl.BlockSpec((C4, 1), lambda b: (0, 0)),
            pl.BlockSpec((_W2_ROWS, C4), lambda b: (0, 0)),
            pl.BlockSpec((_W2_ROWS, 1), lambda b: (0, 0)),
        ],
        out_specs=[
            pl.BlockSpec((TB, 1, HW), lambda b: (b, 0, 0)),
            pl.BlockSpec((TB, 4, HW), lambda b: (b, 0, 0)),
            pl.BlockSpec((TB, 4, HW), lambda b: (b, 0, 0)),
            pl.BlockSpec((TB, 1, HW), lambda b: (b, 0, 0)),
        ],
        out_shape=[
            jax.ShapeDtypeStruct((B, 1, HW), jnp.float32),
            jax.ShapeDtypeStruct((B, 4, HW), jnp.float32),
            jax.ShapeDtypeStruct((B, 4, HW), jnp.float32),
            jax.ShapeDtypeStruct((B, 1, HW), jnp.float32),
        ],
        scratch_shapes=[pltpu.VMEM((K9, TB * HW), jnp.float32)],   # im2col
        compiler_params=pltpu.CompilerParams(
            dimension_semantics=("parallel",)),
    )(x_flat, packed["w1"], packed["b1"], packed["w2"], packed["b2"])

    # Free reshapes; outputs are already channels-first and unpadded.
    return (p.reshape(B, 1, H, W), xyzph.reshape(B, 4, H, W),
            xyzphs.reshape(B, 4, H, W), bg.reshape(B, 1, H, W))


# ------------------- parameter packing for the fused kernel --------------------

def pack_outnet_params(params, n_inp):
    """Pack the per-branch conv weights into the fused kernel operands (done once)."""
    C = n_inp

    def conv3x3_block(w_hwio):                 # (3,3,C,C) HWIO -> (C_out, 9*C_in)
        return jnp.transpose(w_hwio.reshape(9, C, C), (2, 0, 1)).reshape(C, 9 * C)

    w1 = jnp.concatenate([conv3x3_block(params["p_w1"]),
                          conv3x3_block(params["xyzph_w1"]),
                          conv3x3_block(params["xyzphs_w1"]),
                          conv3x3_block(params["bg_w1"])], axis=0)        # (4C, 9C)
    b1 = jnp.concatenate([params["p_b1"], params["xyzph_b1"],
                          params["xyzphs_b1"], params["bg_b1"]])[:, None]  # (4C, 1)

    # Block-diagonal fused 1x1 heads; each head's rows start on a sublane boundary.
    w2 = jnp.zeros((_W2_ROWS, 4 * C), jnp.float32)
    b2 = jnp.zeros((_W2_ROWS,), jnp.float32)
    for name, cout, blk in (("p", 1, 0), ("xyzph", 4, 1),
                            ("xyzphs", 4, 2), ("bg", 1, 3)):
        r = _HEAD_ROW[name]
        w2 = w2.at[r:r + cout, blk * C:(blk + 1) * C].set(params[f"{name}_w2"].T)
        b2 = b2.at[r:r + cout].set(params[f"{name}_b2"])
    return {"w1": w1, "b1": b1, "w2": w2, "b2": b2[:, None]}


# ---------------- parameter init (deterministic, synthetic) --------------------

def _kaiming_normal_hwio(key, kh, kw, cin, cout, gain):
    std = gain / jnp.sqrt(jnp.float32(cin * kh * kw))
    return std * jax.random.normal(key, (kh, kw, cin, cout), jnp.float32)


def init_outnet_params(key, n_inp):
    ks = jax.random.split(key, 12)
    g_relu = jnp.sqrt(2.0)       # nonlinearity='relu'
    g_sig = 1.0                  # nonlinearity='sigmoid'
    g_tanh = 5.0 / 3.0           # nonlinearity='tanh'

    def default_bias(k, n):
        bound = 1.0 / jnp.sqrt(jnp.float32(n_inp * 9))
        return jax.random.uniform(k, (n,), jnp.float32, -bound, bound)

    return {
        "p_w1": _kaiming_normal_hwio(ks[0], 3, 3, n_inp, n_inp, g_relu),
        "p_b1": default_bias(ks[1], n_inp),
        "p_w2": _kaiming_normal_hwio(ks[2], 1, 1, n_inp, 1, g_sig)[0, 0],
        "p_b2": jnp.full((1,), -6.0, jnp.float32),
        "xyzph_w1": _kaiming_normal_hwio(ks[3], 3, 3, n_inp, n_inp, g_relu),
        "xyzph_b1": default_bias(ks[4], n_inp),
        "xyzph_w2": _kaiming_normal_hwio(ks[5], 1, 1, n_inp, 4, g_tanh)[0, 0],
        "xyzph_b2": jnp.zeros((4,), jnp.float32),
        "xyzphs_w1": _kaiming_normal_hwio(ks[6], 3, 3, n_inp, n_inp, g_relu),
        "xyzphs_b1": default_bias(ks[7], n_inp),
        "xyzphs_w2": _kaiming_normal_hwio(ks[8], 1, 1, n_inp, 4, g_sig)[0, 0],
        "xyzphs_b2": jnp.zeros((4,), jnp.float32),
        "bg_w1": _kaiming_normal_hwio(ks[9], 3, 3, n_inp, n_inp, g_relu),
        "bg_b1": default_bias(ks[10], n_inp),
        "bg_w2": _kaiming_normal_hwio(ks[11], 1, 1, n_inp, 1, g_sig)[0, 0],
        "bg_b2": jnp.zeros((1,), jnp.float32),
    }


# -------------------- pure-JAX reference for verification ----------------------

def _ref_branch(x_nhwc, w1_hwio, b1, w2_io, b2):
    dn = ("NHWC", "HWIO", "NHWC")
    y = lax.conv_general_dilated(x_nhwc, w1_hwio, (1, 1), "SAME",
                                 dimension_numbers=dn) + b1
    y = jnp.where(y > 0, y, jnp.expm1(y))
    z = lax.conv_general_dilated(y, w2_io[None, None], (1, 1), "VALID",
                                 dimension_numbers=dn) + b2
    return jnp.transpose(z, (0, 3, 1, 2))


def outnet_reference(params, x_nchw):
    x = jnp.transpose(x_nchw, (0, 2, 3, 1))
    return (
        _ref_branch(x, params["p_w1"], params["p_b1"], params["p_w2"], params["p_b2"]),
        _ref_branch(x, params["xyzph_w1"], params["xyzph_b1"], params["xyzph_w2"], params["xyzph_b2"]),
        _ref_branch(x, params["xyzphs_w1"], params["xyzphs_b1"], params["xyzphs_w2"], params["xyzphs_b2"]),
        _ref_branch(x, params["bg_w1"], params["bg_b1"], params["bg_w2"], params["bg_b2"]),
    )


if __name__ == "__main__":
    key = jax.random.PRNGKey(0)
    k_param, k_x = jax.random.split(key)

    C, H, W = 8, 16, 16   # n_inp = 8
    params = init_outnet_params(k_param, C)
    packed = pack_outnet_params(params, C)
    fwd = jax.jit(outnet_forward)

    # B=2 exercises TB=1 / grid=2 (v7x two-core split);
    # B=8 exercises the TB=4 batched-step path (col = (72, 1024)).
    for B in (2, 8):
        x = jax.random.normal(jax.random.fold_in(k_x, B), (B, C, H, W), jnp.float32)
        outs = jax.block_until_ready(fwd(packed, x))
        refs = jax.block_until_ready(outnet_reference(params, x))

        assert outs[0].shape == (B, 1, H, W)
        assert outs[1].shape == (B, 4, H, W)
        assert outs[2].shape == (B, 4, H, W)
        assert outs[3].shape == (B, 1, H, W)
        for o, r in zip(outs, refs):
            assert jnp.allclose(o, r, rtol=1e-4, atol=1e-4), float(jnp.max(jnp.abs(o - r)))

    print("KERNEL_OK")
</pallas_src>

<mosaic_0001>
module attributes {stable_mosaic.version = 11 : i64} {
  func.func @_outnet_kernel(%arg0: i32, %arg1: memref<1x8x256xf32, #tpu.memory_space<vmem>>, %arg2: memref<32x72xf32, #tpu.memory_space<vmem>>, %arg3: memref<32x1xf32, #tpu.memory_space<vmem>>, %arg4: memref<32x32xf32, #tpu.memory_space<vmem>>, %arg5: memref<32x1xf32, #tpu.memory_space<vmem>>, %arg6: memref<1x1x256xf32, #tpu.memory_space<vmem>>, %arg7: memref<1x4x256xf32, #tpu.memory_space<vmem>>, %arg8: memref<1x4x256xf32, #tpu.memory_space<vmem>>, %arg9: memref<1x1x256xf32, #tpu.memory_space<vmem>>, %arg10: memref<72x256xf32, #tpu.memory_space<vmem>>) attributes {dimension_semantics = [#tpu.dimension_semantics<parallel>], iteration_bounds = array<i64: 2>, scalar_prefetch = 0 : i64, scratch_operands = 1 : i64, tpu.core_type = #tpu.core_type<tc>, window_params = [{transform_indices = @transform_0, window_bounds = array<i64: 1, 8, 256>}, {pipeline_mode = #tpu.pipeline_mode<synchronous>, transform_indices = @transform_1, window_bounds = array<i64: 32, 72>}, {pipeline_mode = #tpu.pipeline_mode<synchronous>, transform_indices = @transform_2, window_bounds = array<i64: 32, 1>}, {pipeline_mode = #tpu.pipeline_mode<synchronous>, transform_indices = @transform_3, window_bounds = array<i64: 32, 32>}, {pipeline_mode = #tpu.pipeline_mode<synchronous>, transform_indices = @transform_4, window_bounds = array<i64: 32, 1>}, {transform_indices = @transform_5, window_bounds = array<i64: 1, 1, 256>}, {transform_indices = @transform_6, window_bounds = array<i64: 1, 4, 256>}, {transform_indices = @transform_7, window_bounds = array<i64: 1, 4, 256>}, {transform_indices = @transform_8, window_bounds = array<i64: 1, 1, 256>}]} {
    %0 = tpu.iota {dimensions = array<i32: 1>} : vector<1x256xi32>
    %c15_i32 = arith.constant 15 : i32
    %1 = vector.broadcast %c15_i32 : i32 to vector<1x256xi32>
    %2 = arith.andi %0, %1 : vector<1x256xi32>
    %c4_i32 = arith.constant 4 : i32
    %3 = vector.broadcast %c4_i32 : i32 to vector<1x256xi32>
    %4 = arith.shrsi %0, %3 : vector<1x256xi32>
    %c0_i32 = arith.constant 0 : i32
    %5 = vector.broadcast %c0_i32 : i32 to vector<1x256xi32>
    %6 = arith.cmpi ne, %2, %5 : vector<1x256xi32>
    %c15_i32_0 = arith.constant 15 : i32
    %7 = vector.broadcast %c15_i32_0 : i32 to vector<1x256xi32>
    %8 = arith.cmpi ne, %2, %7 : vector<1x256xi32>
    %c0_i32_1 = arith.constant 0 : i32
    %9 = vector.broadcast %c0_i32_1 : i32 to vector<1x256xi32>
    %10 = arith.cmpi ne, %4, %9 : vector<1x256xi32>
    %c15_i32_2 = arith.constant 15 : i32
    %11 = vector.broadcast %c15_i32_2 : i32 to vector<1x256xi32>
    %12 = arith.cmpi ne, %4, %11 : vector<1x256xi32>
    %13 = arith.andi %10, %6 : vector<1x256xi1>
    %14 = arith.andi %10, %8 : vector<1x256xi1>
    %15 = arith.andi %12, %6 : vector<1x256xi1>
    %16 = arith.andi %12, %8 : vector<1x256xi1>
    %c0 = arith.constant 0 : index
    %c0_3 = arith.constant 0 : index
    %c0_4 = arith.constant 0 : index
    %17 = vector.load %arg1[%c0, %c0_3, %c0_4] : memref<1x8x256xf32, #tpu.memory_space<vmem>>, vector<1x8x256xf32>
    %18 = vector.shape_cast %17 : vector<1x8x256xf32> to vector<8x256xf32>
    %c17_i32 = arith.constant 17 : i32
    %19 = tpu.dynamic_rotate %18 by %c17_i32 dim 1 : vector<8x256xf32>, i32 -> vector<8x256xf32>
    %cst = arith.constant 0.000000e+00 : f32
    %20 = vector.shape_cast %13 : vector<1x256xi1> to vector<1x256xi1>
    %21 = vector.broadcast %20 : vector<1x256xi1> to vector<8x256xi1>
    %22 = vector.broadcast %cst : f32 to vector<8x256xf32>
    %23 = arith.select %21, %19, %22 : vector<8x256xi1>, vector<8x256xf32>
    %c0_5 = arith.constant 0 : index
    %c0_6 = arith.constant 0 : index
    %24 = vector.load %arg10[%c0_5, %c0_6] : memref<72x256xf32, #tpu.memory_space<vmem>>, vector<8x256xf32>
    tpu.vector_store %arg10[%c0_5, %c0_6], %23 {strides = array<i32>} : memref<72x256xf32, #tpu.memory_space<vmem>>, vector<8x256xf32>,
    %c16_i32 = arith.constant 16 : i32
    %25 = tpu.dynamic_rotate %18 by %c16_i32 dim 1 : vector<8x256xf32>, i32 -> vector<8x256xf32>
    %cst_7 = arith.constant 0.000000e+00 : f32
    %26 = vector.shape_cast %10 : vector<1x256xi1> to vector<1x256xi1>
    %27 = vector.broadcast %26 : vector<1x256xi1> to vector<8x256xi1>
    %28 = vector.broadcast %cst_7 : f32 to vector<8x256xf32>
    %29 = arith.select %27, %25, %28 : vector<8x256xi1>, vector<8x256xf32>
    %c8 = arith.constant 8 : index
    %c0_8 = arith.constant 0 : index
    %30 = vector.load %arg10[%c8, %c0_8] : memref<72x256xf32, #tpu.memory_space<vmem>>, vector<8x256xf32>
    tpu.vector_store %arg10[%c8, %c0_8], %29 {strides = array<i32>} : memref<72x256xf32, #tpu.memory_space<vmem>>, vector<8x256xf32>,
    %c15_i32_9 = arith.constant 15 : i32
    %31 = tpu.dynamic_rotate %18 by %c15_i32_9 dim 1 : vector<8x256xf32>, i32 -> vector<8x256xf32>
    %cst_10 = arith.constant 0.000000e+00 : f32
    %32 = vector.shape_cast %14 : vector<1x256xi1> to vector<1x256xi1>
    %33 = vector.broadcast %32 : vector<1x256xi1> to vector<8x256xi1>
    %34 = vector.broadcast %cst_10 : f32 to vector<8x256xf32>
    %35 = arith.select %33, %31, %34 : vector<8x256xi1>, vector<8x256xf32>
    %c16 = arith.constant 16 : index
    %c0_11 = arith.constant 0 : index
    %36 = vector.load %arg10[%c16, %c0_11] : memref<72x256xf32, #tpu.memory_space<vmem>>, vector<8x256xf32>
    tpu.vector_store %arg10[%c16, %c0_11], %35 {strides = array<i32>} : memref<72x256xf32, #tpu.memory_space<vmem>>, vector<8x256xf32>,
    %c1_i32 = arith.constant 1 : i32
    %37 = tpu.dynamic_rotate %18 by %c1_i32 dim 1 : vector<8x256xf32>, i32 -> vector<8x256xf32>
    %cst_12 = arith.constant 0.000000e+00 : f32
    %38 = vector.shape_cast %6 : vector<1x256xi1> to vector<1x256xi1>
    %39 = vector.broadcast %38 : vector<1x256xi1> to vector<8x256xi1>
    %40 = vector.broadcast %cst_12 : f32 to vector<8x256xf32>
    %41 = arith.select %39, %37, %40 : vector<8x256xi1>, vector<8x256xf32>
    %c24 = arith.constant 24 : index
    %c0_13 = arith.constant 0 : index
    %42 = vector.load %arg10[%c24, %c0_13] : memref<72x256xf32, #tpu.memory_space<vmem>>, vector<8x256xf32>
    tpu.vector_store %arg10[%c24, %c0_13], %41 {strides = array<i32>} : memref<72x256xf32, #tpu.memory_space<vmem>>, vector<8x256xf32>,
    %c32 = arith.constant 32 : index
    %c0_14 = arith.constant 0 : index
    %43 = vector.load %arg10[%c32, %c0_14] : memref<72x256xf32, #tpu.memory_space<vmem>>, vector<8x256xf32>
    tpu.vector_store %arg10[%c32, %c0_14], %18 {strides = array<i32>} : memref<72x256xf32, #tpu.memory_space<vmem>>, vector<8x256xf32>,
    %c255_i32 = arith.constant 255 : i32
    %44 = tpu.dynamic_rotate %18 by %c255_i32 dim 1 : vector<8x256xf32>, i32 -> vector<8x256xf32>
    %cst_15 = arith.constant 0.000000e+00 : f32
    %45 = vector.shape_cast %8 : vector<1x256xi1> to vector<1x256xi1>
    %46 = vector.broadcast %45 : vector<1x256xi1> to vector<8x256xi1>
    %47 = vector.broadcast %cst_15 : f32 to vector<8x256xf32>
    %48 = arith.select %46, %44, %47 : vector<8x256xi1>, vector<8x256xf32>
    %c40 = arith.constant 40 : index
    %c0_16 = arith.constant 0 : index
    %49 = vector.load %arg10[%c40, %c0_16] : memref<72x256xf32, #tpu.memory_space<vmem>>, vector<8x256xf32>
    tpu.vector_store %arg10[%c40, %c0_16], %48 {strides = array<i32>} : memref<72x256xf32, #tpu.memory_space<vmem>>, vector<8x256xf32>,
    %c241_i32 = arith.constant 241 : i32
    %50 = tpu.dynamic_rotate %18 by %c241_i32 dim 1 : vector<8x256xf32>, i32 -> vector<8x256xf32>
    %cst_17 = arith.constant 0.000000e+00 : f32
    %51 = vector.shape_cast %15 : vector<1x256xi1> to vector<1x256xi1>
    %52 = vector.broadcast %51 : vector<1x256xi1> to vector<8x256xi1>
    %53 = vector.broadcast %cst_17 : f32 to vector<8x256xf32>
    %54 = arith.select %52, %50, %53 : vector<8x256xi1>, vector<8x256xf32>
    %c48 = arith.constant 48 : index
    %c0_18 = arith.constant 0 : index
    %55 = vector.load %arg10[%c48, %c0_18] : memref<72x256xf32, #tpu.memory_space<vmem>>, vector<8x256xf32>
    tpu.vector_store %arg10[%c48, %c0_18], %54 {strides = array<i32>} : memref<72x256xf32, #tpu.memory_space<vmem>>, vector<8x256xf32>,
    %c240_i32 = arith.constant 240 : i32
    %56 = tpu.dynamic_rotate %18 by %c240_i32 dim 1 : vector<8x256xf32>, i32 -> vector<8x256xf32>
    %cst_19 = arith.constant 0.000000e+00 : f32
    %57 = vector.shape_cast %12 : vector<1x256xi1> to vector<1x256xi1>
    %58 = vector.broadcast %57 : vector<1x256xi1> to vector<8x256xi1>
    %59 = vector.broadcast %cst_19 : f32 to vector<8x256xf32>
    %60 = arith.select %58, %56, %59 : vector<8x256xi1>, vector<8x256xf32>
    %c56 = arith.constant 56 : index
    %c0_20 = arith.constant 0 : index
    %61 = vector.load %arg10[%c56, %c0_20] : memref<72x256xf32, #tpu.memory_space<vmem>>, vector<8x256xf32>
    tpu.vector_store %arg10[%c56, %c0_20], %60 {strides = array<i32>} : memref<72x256xf32, #tpu.memory_space<vmem>>, vector<8x256xf32>,
    %c239_i32 = arith.constant 239 : i32
    %62 = tpu.dynamic_rotate %18 by %c239_i32 dim 1 : vector<8x256xf32>, i32 -> vector<8x256xf32>
    %cst_21 = arith.constant 0.000000e+00 : f32
    %63 = vector.shape_cast %16 : vector<1x256xi1> to vector<1x256xi1>
    %64 = vector.broadcast %63 : vector<1x256xi1> to vector<8x256xi1>
    %65 = vector.broadcast %cst_21 : f32 to vector<8x256xf32>
    %66 = arith.select %64, %62, %65 : vector<8x256xi1>, vector<8x256xf32>
    %c64 = arith.constant 64 : index
    %c0_22 = arith.constant 0 : index
    %67 = vector.load %arg10[%c64, %c0_22] : memref<72x256xf32, #tpu.memory_space<vmem>>, vector<8x256xf32>
    tpu.vector_store %arg10[%c64, %c0_22], %66 {strides = array<i32>} : memref<72x256xf32, #tpu.memory_space<vmem>>, vector<8x256xf32>,
    %c0_23 = arith.constant 0 : index
    %c0_24 = arith.constant 0 : index
    %68 = vector.load %arg2[%c0_23, %c0_24] : memref<32x72xf32, #tpu.memory_space<vmem>>, vector<32x72xf32>
    %c0_25 = arith.constant 0 : index
    %c0_26 = arith.constant 0 : index
    %69 = vector.load %arg10[%c0_25, %c0_26] : memref<72x256xf32, #tpu.memory_space<vmem>>, vector<72x256xf32>
    %cst_27 = arith.constant dense<0.000000e+00> : vector<32x256xf32>
    %70 = tpu.matmul %68, %69, %cst_27 {dimension_numbers = #tpu.dot_dimension_numbers<[1], [0], [0], [1], [0, 0, 1, 1], [], []>} : vector<32x72xf32>, vector<72x256xf32>, vector<32x256xf32> -> vector<32x256xf32>
    %c0_28 = arith.constant 0 : index
    %c0_29 = arith.constant 0 : index
    %71 = vector.load %arg3[%c0_28, %c0_29] : memref<32x1xf32, #tpu.memory_space<vmem>>, vector<32x1xf32>
    %72 = vector.broadcast %71 : vector<32x1xf32> to vector<32x256xf32>
    %73 = arith.addf %70, %72 : vector<32x256xf32>
    %cst_30 = arith.constant 0.000000e+00 : f32
    %74 = vector.broadcast %cst_30 : f32 to vector<32x256xf32>
    %75 = arith.cmpf ogt, %73, %74 : vector<32x256xf32>
    %cst_31 = arith.constant 0.000000e+00 : f32
    %76 = vector.broadcast %cst_31 : f32 to vector<32x256xf32>
    %77 = arith.minimumf %73, %76 : vector<32x256xf32>
    %78 = math.exp %77 : vector<32x256xf32>
    %cst_32 = arith.constant 1.000000e+00 : f32
    %79 = vector.broadcast %cst_32 : f32 to vector<32x256xf32>
    %80 = arith.subf %78, %79 : vector<32x256xf32>
    %81 = arith.select %75, %73, %80 : vector<32x256xi1>, vector<32x256xf32>
    %c0_33 = arith.constant 0 : index
    %c0_34 = arith.constant 0 : index
    %82 = vector.load %arg4[%c0_33, %c0_34] : memref<32x32xf32, #tpu.memory_space<vmem>>, vector<32x32xf32>
    %cst_35 = arith.constant dense<0.000000e+00> : vector<32x256xf32>
    %83 = tpu.matmul %82, %81, %cst_35 {dimension_numbers = #tpu.dot_dimension_numbers<[1], [0], [0], [1], [0, 0, 1, 1], [], []>} : vector<32x32xf32>, vector<32x256xf32>, vector<32x256xf32> -> vector<32x256xf32>
    %c0_36 = arith.constant 0 : index
    %c0_37 = arith.constant 0 : index
    %84 = vector.load %arg5[%c0_36, %c0_37] : memref<32x1xf32, #tpu.memory_space<vmem>>, vector<32x1xf32>
    %85 = vector.broadcast %84 : vector<32x1xf32> to vector<32x256xf32>
    %86 = arith.addf %83, %85 : vector<32x256xf32>
    %87 = vector.extract_strided_slice %86 {offsets = [0, 0], sizes = [1, 256], strides = [1, 1]} : vector<32x256xf32> to vector<1x256xf32>
    %c0_38 = arith.constant 0 : index
    %c0_39 = arith.constant 0 : index
    %c0_40 = arith.constant 0 : index
    %88 = vector.load %arg6[%c0_38, %c0_39, %c0_40] : memref<1x1x256xf32, #tpu.memory_space<vmem>>, vector<1x1x256xf32>
    %89 = vector.shape_cast %88 : vector<1x1x256xf32> to vector<1x256xf32>
    %90 = vector.shape_cast %87 : vector<1x256xf32> to vector<1x1x256xf32>
    tpu.vector_store %arg6[%c0_38, %c0_39, %c0_40], %90 {strides = array<i32>} : memref<1x1x256xf32, #tpu.memory_space<vmem>>, vector<1x1x256xf32>,
    %91 = vector.extract_strided_slice %86 {offsets = [8, 0], sizes = [4, 256], strides = [1, 1]} : vector<32x256xf32> to vector<4x256xf32>
    %c0_41 = arith.constant 0 : index
    %c0_42 = arith.constant 0 : index
    %c0_43 = arith.constant 0 : index
    %92 = vector.load %arg7[%c0_41, %c0_42, %c0_43] : memref<1x4x256xf32, #tpu.memory_space<vmem>>, vector<1x4x256xf32>
    %93 = vector.shape_cast %92 : vector<1x4x256xf32> to vector<4x256xf32>
    %94 = vector.shape_cast %91 : vector<4x256xf32> to vector<1x4x256xf32>
    tpu.vector_store %arg7[%c0_41, %c0_42, %c0_43], %94 {strides = array<i32>} : memref<1x4x256xf32, #tpu.memory_space<vmem>>, vector<1x4x256xf32>,
    %95 = vector.extract_strided_slice %86 {offsets = [16, 0], sizes = [4, 256], strides = [1, 1]} : vector<32x256xf32> to vector<4x256xf32>
    %c0_44 = arith.constant 0 : index
    %c0_45 = arith.constant 0 : index
    %c0_46 = arith.constant 0 : index
    %96 = vector.load %arg8[%c0_44, %c0_45, %c0_46] : memref<1x4x256xf32, #tpu.memory_space<vmem>>, vector<1x4x256xf32>
    %97 = vector.shape_cast %96 : vector<1x4x256xf32> to vector<4x256xf32>
    %98 = vector.shape_cast %95 : vector<4x256xf32> to vector<1x4x256xf32>
    tpu.vector_store %arg8[%c0_44, %c0_45, %c0_46], %98 {strides = array<i32>} : memref<1x4x256xf32, #tpu.memory_space<vmem>>, vector<1x4x256xf32>,
    %99 = vector.extract_strided_slice %86 {offsets = [24, 0], sizes = [1, 256], strides = [1, 1]} : vector<32x256xf32> to vector<1x256xf32>
    %c0_47 = arith.constant 0 : index
    %c0_48 = arith.constant 0 : index
    %c0_49 = arith.constant 0 : index
    %100 = vector.load %arg9[%c0_47, %c0_48, %c0_49] : memref<1x1x256xf32, #tpu.memory_space<vmem>>, vector<1x1x256xf32>
    %101 = vector.shape_cast %100 : vector<1x1x256xf32> to vector<1x256xf32>
    %102 = vector.shape_cast %99 : vector<1x256xf32> to vector<1x1x256xf32>
    tpu.vector_store %arg9[%c0_47, %c0_48, %c0_49], %102 {strides = array<i32>} : memref<1x1x256xf32, #tpu.memory_space<vmem>>, vector<1x1x256xf32>,
    return
  }
  func.func @transform_0(%arg0: i32) -> (i32, i32, i32) {
    %c0_i32 = arith.constant 0 : i32
    %c0_i32_0 = arith.constant 0 : i32
    %c0_i32_1 = arith.constant 0 : i32
    return %arg0, %c0_i32, %c0_i32_0 : i32, i32, i32
  }
  func.func @transform_1(%arg0: i32) -> (i32, i32) {
    %c0_i32 = arith.constant 0 : i32
    %c0_i32_0 = arith.constant 0 : i32
    %c0_i32_1 = arith.constant 0 : i32
    return %c0_i32, %c0_i32_0 : i32, i32
  }
  func.func @transform_2(%arg0: i32) -> (i32, i32) {
    %c0_i32 = arith.constant 0 : i32
    %c0_i32_0 = arith.constant 0 : i32
    %c0_i32_1 = arith.constant 0 : i32
    return %c0_i32, %c0_i32_0 : i32, i32
  }
  func.func @transform_3(%arg0: i32) -> (i32, i32) {
    %c0_i32 = arith.constant 0 : i32
    %c0_i32_0 = arith.constant 0 : i32
    %c0_i32_1 = arith.constant 0 : i32
    return %c0_i32, %c0_i32_0 : i32, i32
  }
  func.func @transform_4(%arg0: i32) -> (i32, i32) {
    %c0_i32 = arith.constant 0 : i32
    %c0_i32_0 = arith.constant 0 : i32
    %c0_i32_1 = arith.constant 0 : i32
    return %c0_i32, %c0_i32_0 : i32, i32
  }
  func.func @transform_5(%arg0: i32) -> (i32, i32, i32) {
    %c0_i32 = arith.constant 0 : i32
    %c0_i32_0 = arith.constant 0 : i32
    %c0_i32_1 = arith.constant 0 : i32
    return %arg0, %c0_i32, %c0_i32_0 : i32, i32, i32
  }
  func.func @transform_6(%arg0: i32) -> (i32, i32, i32) {
    %c0_i32 = arith.constant 0 : i32
    %c0_i32_0 = arith.constant 0 : i32
    %c0_i32_1 = arith.constant 0 : i32
    return %arg0, %c0_i32, %c0_i32_0 : i32, i32, i32
  }
  func.func @transform_7(%arg0: i32) -> (i32, i32, i32) {
    %c0_i32 = arith.constant 0 : i32
    %c0_i32_0 = arith.constant 0 : i32
    %c0_i32_1 = arith.constant 0 : i32
    return %arg0, %c0_i32, %c0_i32_0 : i32, i32, i32
  }
  func.func @transform_8(%arg0: i32) -> (i32, i32, i32) {
    %c0_i32 = arith.constant 0 : i32
    %c0_i32_0 = arith.constant 0 : i32
    %c0_i32_1 = arith.constant 0 : i32
    return %arg0, %c0_i32, %c0_i32_0 : i32, i32, i32
  }
}

</mosaic_0001>

<llo_original>
// kernel: outnet_forward.1
$region0: #{outnet_forward.1}
  #allocation0 [shape = 'u32[]', space=smem, size = 0x4, offset = 0x4, fixed_abs, tag = 'smem constant byte address 0x4 - core index']
  #allocation1 [shape = 'u32[144,128]{1,0:T(1,128)}', space=vmem, size = 0x12000, scoped, tag = 'internal scratch']
  #allocation2 [shape = 'f32[72,256]{1,0:T(8,128)}', space=vmem, size = 0x12000, scoped, tag = 'scratch operand']
  %s0 = inlined_call_operand.vmem [shape: f32[2,8,256], index: 0, kind: input, shape index: {}]
  %s1 = inlined_call_operand.vmem [shape: f32[32,72], index: 1, kind: input, shape index: {}]
  %s2 = inlined_call_operand.vmem [shape: f32[32,1], index: 2, kind: input, shape index: {}]
  %s3 = inlined_call_operand.vmem [shape: f32[32,32], index: 3, kind: input, shape index: {}]
  %s4 = inlined_call_operand.vmem [shape: f32[32,1], index: 4, kind: input, shape index: {}]
  %s5 = inlined_call_operand.vmem [shape: f32[2,1,256], index: 5, kind: output, shape index: {0}]
  %s6 = inlined_call_operand.vmem [shape: f32[2,4,256], index: 6, kind: output, shape index: {1}]
  %s7 = inlined_call_operand.vmem [shape: f32[2,4,256], index: 7, kind: output, shape index: {2}]
  %s8 = inlined_call_operand.vmem [shape: f32[2,1,256], index: 8, kind: output, shape index: {3}]
  %9 = xla_tuple %s5, %s6, %s7, %s8
  %s10 = sld [smem:[#allocation0]]
  $region77: #{outnet_forward.1} parent=0
    _
  %s12 = ssub.s32 1, %s10
  %s13 = scalar_select 0, %s12, %s10
  loop: start=0, step=1, limit=4
  $region2: #{outnet_forward.1} parent=0 // loop_pre_header
    _
  $region3: #{outnet_forward.1} parent=0 // loop_header
    %s15 = sphi 0, %s19
    %p16 = scmp.ge.s32.totalorder %s15, 4
    %s25 = sphi 0, %s27
    %s28 = sphi 0, %s25
    %s29 = sphi 0, %s28
    %s45 = sphi 0, %s29
    %s49 = sphi 0, %s49
    %s51 = sphi 0, %s49
    %s52 = sphi 0, %s51
    %s66 = sphi 0, %s52
    %s70 = sphi 0, %s70
    %s72 = sphi 0, %s70
    %s73 = sphi 0, %s72
    %s87 = sphi 0, %s73
    %s91 = sphi 0, %s91
    %s93 = sphi 0, %s91
    %s94 = sphi 0, %s93
    %s108 = sphi 0, %s94
    %s112 = sphi 0, %s112
    %s114 = sphi 0, %s112
    %s115 = sphi 0, %s114
    %s129 = sphi 0, %s115
    %s135 = sphi 0, %s137
    %s138 = sphi 0, %s135
    %s139 = sphi 0, %s138
    %s155 = sphi 0, %s139
    %s161 = sphi 0, %s163
    %s164 = sphi 0, %s161
    %s165 = sphi 0, %s164
    %s181 = sphi 0, %s165
    %s187 = sphi 0, %s189
    %s190 = sphi 0, %s187
    %s191 = sphi 0, %s190
    %s207 = sphi 0, %s191
    %s213 = sphi 0, %s215
    %s216 = sphi 0, %s213
    %s217 = sphi 0, %s216
    %s233 = sphi 0, %s217
  $region4: #{outnet_forward.1} parent=0 // loop_header_branch
    %18 = sbr.rel (%p16) target = $region8
  $region5: #{outnet_forward.1} parent=0 // loop_body
    %s20 = ssub.s32 %s15, 1
    %s21 = ssub.s32 %s15, 2
    %s22 = sadd.s32 %s15, 1
    %s23 = ssub.s32 %s15, %s22
    %p24 = scmp.eq.s32.totalorder %s23, 0
    %s26 = sadd.s32 %s25, 1
    %s27 = scalar_select %p24, %s25, %s26
    %p30 = pneg %p24
    %p31 = scmp.eq.s32.totalorder %s15, 1
    %p32 = por %p30, %p31
    %p33 = scmp.ne.s32.totalorder %s25, %s28
    %p34 = scmp.eq.s32.totalorder %s15, 0
    %p35 = por %p33, %p34
    %p36 = scmp.ne.s32.totalorder %s25, %s28
    %p37 = scmp.eq.s32.totalorder %s20, 1
    %p38 = por %p36, %p37
    %p39 = scmp.ne.s32.totalorder %s28, %s29
    %p40 = scmp.eq.s32.totalorder %s20, 0
    %p41 = por %p39, %p40
    %p42 = scmp.ne.s32.totalorder %s28, %s29
    %p43 = scmp.eq.s32.totalorder %s21, 1
    %p44 = por %p42, %p43
    %p46 = scmp.ne.s32.totalorder %s29, %s45
    %p47 = scmp.eq.s32.totalorder %s21, 0
    %p48 = por %p46, %p47
    %s50 = sadd.s32 %s49, 1
    %p53 = scmp.eq.s32.totalorder %s15, 1
    %p54 = scmp.ne.s32.totalorder %s49, %s51
    %p55 = scmp.eq.s32.totalorder %s15, 0
    %p56 = por %p54, %p55
    %p57 = scmp.ne.s32.totalorder %s49, %s51
    %p58 = scmp.eq.s32.totalorder %s20, 1
    %p59 = por %p57, %p58
    %p60 = scmp.ne.s32.totalorder %s51, %s52
    %p61 = scmp.eq.s32.totalorder %s20, 0
    %p62 = por %p60, %p61
    %p63 = scmp.ne.s32.totalorder %s51, %s52
    %p64 = scmp.eq.s32.totalorder %s21, 1
    %p65 = por %p63, %p64
    %p67 = scmp.ne.s32.totalorder %s52, %s66
    %p68 = scmp.eq.s32.totalorder %s21, 0
    %p69 = por %p67, %p68
    %s71 = sadd.s32 %s70, 1
    %p74 = scmp.eq.s32.totalorder %s15, 1
    %p75 = scmp.ne.s32.totalorder %s70, %s72
    %p76 = scmp.eq.s32.totalorder %s15, 0
    %p77 = por %p75, %p76
    %p78 = scmp.ne.s32.totalorder %s70, %s72
    %p79 = scmp.eq.s32.totalorder %s20, 1
    %p80 = por %p78, %p79
    %p81 = scmp.ne.s32.totalorder %s72, %s73
    %p82 = scmp.eq.s32.totalorder %s20, 0
    %p83 = por %p81, %p82
    %p84 = scmp.ne.s32.totalorder %s72, %s73
    %p85 = scmp.eq.s32.totalorder %s21, 1
    %p86 = por %p84, %p85
    %p88 = scmp.ne.s32.totalorder %s73, %s87
    %p89 = scmp.eq.s32.totalorder %s21, 0
    %p90 = por %p88, %p89
    %s92 = sadd.s32 %s91, 1
    %p95 = scmp.eq.s32.totalorder %s15, 1
    %p96 = scmp.ne.s32.totalorder %s91, %s93
    %p97 = scmp.eq.s32.totalorder %s15, 0
    %p98 = por %p96, %p97
    %p99 = scmp.ne.s32.totalorder %s91, %s93
    %p100 = scmp.eq.s32.totalorder %s20, 1
    %p101 = por %p99, %p100
    %p102 = scmp.ne.s32.totalorder %s93, %s94
    %p103 = scmp.eq.s32.totalorder %s20, 0
    %p104 = por %p102, %p103
    %p105 = scmp.ne.s32.totalorder %s93, %s94
    %p106 = scmp.eq.s32.totalorder %s21, 1
    %p107 = por %p105, %p106
    %p109 = scmp.ne.s32.totalorder %s94, %s108
    %p110 = scmp.eq.s32.totalorder %s21, 0
    %p111 = por %p109, %p110
    %s113 = sadd.s32 %s112, 1
    %p116 = scmp.eq.s32.totalorder %s15, 1
    %p117 = scmp.ne.s32.totalorder %s112, %s114
    %p118 = scmp.eq.s32.totalorder %s15, 0
    %p119 = por %p117, %p118
    %p120 = scmp.ne.s32.totalorder %s112, %s114
    %p121 = scmp.eq.s32.totalorder %s20, 1
    %p122 = por %p120, %p121
    %p123 = scmp.ne.s32.totalorder %s114, %s115
    %p124 = scmp.eq.s32.totalorder %s20, 0
    %p125 = por %p123, %p124
    %p126 = scmp.ne.s32.totalorder %s114, %s115
    %p127 = scmp.eq.s32.totalorder %s21, 1
    %p128 = por %p126, %p127
    %p130 = scmp.ne.s32.totalorder %s115, %s129
    %p131 = scmp.eq.s32.totalorder %s21, 0
    %p132 = por %p130, %p131
    %s133 = ssub.s32 %s15, %s22
    %p134 = scmp.eq.s32.totalorder %s133, 0
    %s136 = sadd.s32 %s135, 1
    %s137 = scalar_select %p134, %s135, %s136
    %p140 = pneg %p134
    %p141 = scmp.eq.s32.totalorder %s15, 1
    %p142 = por %p140, %p141
    %p143 = scmp.ne.s32.totalorder %s135, %s138
    %p144 = scmp.eq.s32.totalorder %s15, 0
    %p145 = por %p143, %p144
    %p146 = scmp.ne.s32.totalorder %s135, %s138
    %p147 = scmp.eq.s32.totalorder %s20, 1
    %p148 = por %p146, %p147
    %p149 = scmp.ne.s32.totalorder %s138, %s139
    %p150 = scmp.eq.s32.totalorder %s20, 0
    %p151 = por %p149, %p150
    %p152 = scmp.ne.s32.totalorder %s138, %s139
    %p153 = scmp.eq.s32.totalorder %s21, 1
    %p154 = por %p152, %p153
    %p156 = scmp.ne.s32.totalorder %s139, %s155
    %p157 = scmp.eq.s32.totalorder %s21, 0
    %p158 = por %p156, %p157
    %s159 = ssub.s32 %s15, %s22
    %p160 = scmp.eq.s32.totalorder %s159, 0
    %s162 = sadd.s32 %s161, 1
    %s163 = scalar_select %p160, %s161, %s162
    %p166 = pneg %p160
    %p167 = scmp.eq.s32.totalorder %s15, 1
    %p168 = por %p166, %p167
    %p169 = scmp.ne.s32.totalorder %s161, %s164
    %p170 = scmp.eq.s32.totalorder %s15, 0
    %p171 = por %p169, %p170
    %p172 = scmp.ne.s32.totalorder %s161, %s164
    %p173 = scmp.eq.s32.totalorder %s20, 1
    %p174 = por %p172, %p173
    %p175 = scmp.ne.s32.totalorder %s164, %s165
    %p176 = scmp.eq.s32.totalorder %s20, 0
    %p177 = por %p175, %p176
    %p178 = scmp.ne.s32.totalorder %s164, %s165
    %p179 = scmp.eq.s32.totalorder %s21, 1
    %p180 = por %p178, %p179
    %p182 = scmp.ne.s32.totalorder %s165, %s181
    %p183 = scmp.eq.s32.totalorder %s21, 0
    %p184 = por %p182, %p183
    %s185 = ssub.s32 %s15, %s22
    %p186 = scmp.eq.s32.totalorder %s185, 0
    %s188 = sadd.s32 %s187, 1
    %s189 = scalar_select %p186, %s187, %s188
    %p192 = pneg %p186
    %p193 = scmp.eq.s32.totalorder %s15, 1
    %p194 = por %p192, %p193
    %p195 = scmp.ne.s32.totalorder %s187, %s190
    %p196 = scmp.eq.s32.totalorder %s15, 0
    %p197 = por %p195, %p196
    %p198 = scmp.ne.s32.totalorder %s187, %s190
    %p199 = scmp.eq.s32.totalorder %s20, 1
    %p200 = por %p198, %p199
    %p201 = scmp.ne.s32.totalorder %s190, %s191
    %p202 = scmp.eq.s32.totalorder %s20, 0
    %p203 = por %p201, %p202
    %p204 = scmp.ne.s32.totalorder %s190, %s191
    %p205 = scmp.eq.s32.totalorder %s21, 1
    %p206 = por %p204, %p205
    %p208 = scmp.ne.s32.totalorder %s191, %s207
    %p209 = scmp.eq.s32.totalorder %s21, 0
    %p210 = por %p208, %p209
    %s211 = ssub.s32 %s15, %s22
    %p212 = scmp.eq.s32.totalorder %s211, 0
    %s214 = sadd.s32 %s213, 1
    %s215 = scalar_select %p212, %s213, %s214
    %p218 = pneg %p212
    %p219 = scmp.eq.s32.totalorder %s15, 1
    %p220 = por %p218, %p219
    %p221 = scmp.ne.s32.totalorder %s213, %s216
    %p222 = scmp.eq.s32.totalorder %s15, 0
    %p223 = por %p221, %p222
    %p224 = scmp.ne.s32.totalorder %s213, %s216
    %p225 = scmp.eq.s32.totalorder %s20, 1
    %p226 = por %p224, %p225
    %p227 = scmp.ne.s32.totalorder %s216, %s217
    %p228 = scmp.eq.s32.totalorder %s20, 0
    %p229 = por %p227, %p228
    %p230 = scmp.ne.s32.totalorder %s216, %s217
    %p231 = scmp.eq.s32.totalorder %s21, 1
    %p232 = por %p230, %p231
    %p234 = scmp.ne.s32.totalorder %s217, %s233
    %p235 = scmp.eq.s32.totalorder %s21, 0
    %p236 = por %p234, %p235
    %p237 = scmp.le.s32.totalorder 1, %s15
    %p238 = scmp.lt.s32.totalorder %s15, 3
    %p239 = pnand %p237, %p238
    %p240 = pneg %p239
    // Predicated region
    $region9: #{outnet_forward.1} parent=5 // pred_check
      _
    $region10: #{outnet_forward.1} parent=5 // pred_check_branch
      %242 = sbr.rel (%p239) target = $region12
    $region11: #{outnet_forward.1} parent=5 // pred_region
      %s243 = ssub.s32 %s15, 1
      // Predicated region
      $region13: #{outnet_forward.1} parent=11 // pred_check
        %p244 = pneg %p62
      $region14: #{outnet_forward.1} parent=11 // pred_check_branch
        %246 = sbr.rel (%p244) target = $region16
      $region15: #{outnet_forward.1} parent=11 // pred_region
        _
      $region16: #{outnet_forward.1} parent=11 // pred_fallthru
        _
      // Predicated region
      $region17: #{outnet_forward.1} parent=11 // pred_check
        %p247 = pneg %p83
      $region18: #{outnet_forward.1} parent=11 // pred_check_branch
        %249 = sbr.rel (%p247) target = $region20
      $region19: #{outnet_forward.1} parent=11 // pred_region
        _
      $region20: #{outnet_forward.1} parent=11 // pred_fallthru
        _
      // Predicated region
      $region21: #{outnet_forward.1} parent=11 // pred_check
        %p250 = pneg %p104
      $region22: #{outnet_forward.1} parent=11 // pred_check_branch
        %252 = sbr.rel (%p250) target = $region24
      $region23: #{outnet_forward.1} parent=11 // pred_region
        _
      $region24: #{outnet_forward.1} parent=11 // pred_fallthru
        _
      // Predicated region
      $region25: #{outnet_forward.1} parent=11 // pred_check
        %p253 = pneg %p125
      $region26: #{outnet_forward.1} parent=11 // pred_check_branch
        %255 = sbr.rel (%p253) target = $region28
      $region27: #{outnet_forward.1} parent=11 // pred_region
        _
      $region28: #{outnet_forward.1} parent=11 // pred_fallthru
        _
    $region12: #{outnet_forward.1} parent=5 // pred_fallthru
      _
    %p256 = scmp.lt.s32.totalorder %s15, 2
    // Predicated region
    $region29: #{outnet_forward.1} parent=5 // pred_check
      %p257 = pneg %p256
    $region30: #{outnet_forward.1} parent=5 // pred_check_branch
      %259 = sbr.rel (%p257) target = $region32
    $region31: #{outnet_forward.1} parent=5 // pred_region
      // Predicated region
      $region33: #{outnet_forward.1} parent=31 // pred_check
        %p260 = pneg %p35
      $region34: #{outnet_forward.1} parent=31 // pred_check_branch
        %262 = sbr.rel (%p260) target = $region36
      $region35: #{outnet_forward.1} parent=31 // pred_region
        %p263 = scmp.lt.s32.totalorder %s15, 1
        %s264 = scalar_select %p263, %s15, 1
        %s265 = smul.addr %s264, 2
        %s266 = smul.addr %s265, 8
        %s267 = scalar_lea.vmem %s0, %s266
      $region36: #{outnet_forward.1} parent=31 // pred_fallthru
        _
    $region32: #{outnet_forward.1} parent=5 // pred_fallthru
      _
    %p268 = scmp.le.s32.totalorder 1, %s15
    %p269 = scmp.lt.s32.totalorder %s15, 3
    %p270 = pnand %p268, %p269
    %p271 = pneg %p270
    // Predicated region
    $region37: #{outnet_forward.1} parent=5 // pred_check
      _
    $region38: #{outnet_forward.1} parent=5 // pred_check_branch
      %273 = sbr.rel (%p270) target = $region40
    $region39: #{outnet_forward.1} parent=5 // pred_region
      %s274 = ssub.s32 %s15, 1
      %p275 = scmp.lt.s32.totalorder %s20, 1
      %s276 = scalar_select %p275, %s20, 1
      %s277 = smul.addr %s276, 2
      %s278 = smul.addr %s277, 8
      %s279 = scalar_lea.vmem %s0, %s278
      %p280 = pneg %p41
      %p281 = pneg %p38
      %p282 = pneg %p62
      %p283 = pneg %p59
      %p284 = pneg %p83
      %p285 = pneg %p80
      %p286 = pneg %p104
      %p287 = pneg %p101
      %p288 = pneg %p125
      %p289 = pneg %p122
      %p290 = pneg %p151
      %p291 = pneg %p148
      %p292 = scmp.lt.s32.totalorder %s20, 1
      %s293 = scalar_select %p292, %s20, 1
      %s294 = smul.addr %s293, 2
      %s295 = scalar_lea.vmem %s5, %s294
      %p296 = pneg %p177
      %p297 = pneg %p174
      %p298 = scmp.lt.s32.totalorder %s20, 1
      %s299 = scalar_select %p298, %s20, 1
      %s300 = smul.addr %s299, 2
      %s301 = smul.addr %s300, 4
      %s302 = scalar_lea.vmem %s6, %s301
      %p303 = pneg %p203
      %p304 = pneg %p200
      %p305 = scmp.lt.s32.totalorder %s20, 1
      %s306 = scalar_select %p305, %s20, 1
      %s307 = smul.addr %s306, 2
      %s308 = smul.addr %s307, 4
      %s309 = scalar_lea.vmem %s7, %s308
      %p310 = pneg %p229
      %p311 = pneg %p226
      %p312 = scmp.lt.s32.totalorder %s20, 1
      %s313 = scalar_select %p312, %s20, 1
      %s314 = smul.addr %s313, 2
      %s315 = scalar_lea.vmem %s8, %s314
      %p316 = scmp.lt.s32.totalorder %s20, 1
      %s317 = scalar_select %p316, %s20, 1
      %s318 = smul.addr %s317, 2
      %s319 = smul.addr %s318, 8
      %s320 = scalar_lea.vmem %s0, %s319
      %p321 = scmp.lt.s32.totalorder %s20, 1
      %s322 = scalar_select %p321, %s20, 1
      %s323 = smul.addr %s322, 2
      %s324 = scalar_lea.vmem %s5, %s323
      %p325 = scmp.lt.s32.totalorder %s20, 1
      %s326 = scalar_select %p325, %s20, 1
      %s327 = smul.addr %s326, 2
      %s328 = smul.addr %s327, 4
      %s329 = scalar_lea.vmem %s6, %s328
      %p330 = scmp.lt.s32.totalorder %s20, 1
      %s331 = scalar_select %p330, %s20, 1
      %s332 = smul.addr %s331, 2
      %s333 = smul.addr %s332, 4
      %s334 = scalar_lea.vmem %s7, %s333
      %p335 = scmp.lt.s32.totalorder %s20, 1
      %s336 = scalar_select %p335, %s20, 1
      %s337 = smul.addr %s336, 2
      %s338 = scalar_lea.vmem %s8, %s337
      %v339 = vlaneseq
      %v340 = vand.u32 %v339, 127
      %v341 = vadd.s32 %v340, 128
      %v342 = vand.u32 %v340, 15
      %v343 = vand.u32 %v341, 15
      %v344 = vshra.s32 %v340, 4
      %v345 = vshra.s32 %v341, 4
      %vm346 = vcmp.ne.s32.totalorder %v342, 0
      %vm347 = vcmp.ne.s32.totalorder %v343, 0
      %vm348 = vcmp.ne.s32.totalorder %v342, 15
      %vm349 = vcmp.ne.s32.totalorder %v343, 15
      %vm350 = vcmp.ne.s32.totalorder %v344, 0
      %vm351 = vcmp.ne.s32.totalorder %v345, 0
      %vm352 = vcmp.ne.s32.totalorder %v344, 15
      %vm353 = vcmp.ne.s32.totalorder %v345, 15
      %vm354 = vmand %vm350, %vm346
      %vm355 = vmand %vm351, %vm347
      %vm356 = vmand %vm350, %vm348
      %vm357 = vmand %vm351, %vm349
      %vm358 = vmand %vm352, %vm346
      %vm359 = vmand %vm353, %vm347
      %vm360 = vmand %vm352, %vm348
      %vm361 = vmand %vm353, %vm349
      %v362 = vld [vmem:[%s320] sm:$0xff]
      %v363 = vld [vmem:[%s320 + $0x8] sm:$0xff]
      %364 = vrot.lane.b32.xlu0 %v362, 17
      %v365 = vpop.permute.xlu0 %364
      %366 = vrot.lane.b32.xlu0 %v363, 17
      %v367 = vpop.permute.xlu0 %366
      %vm368 = vcmp.lt.s32.totalorder %v340, 17
      %v369 = vsel %vm368, %v365, %v367
      %v370 = vsel %vm368, %v367, %v365
      %v371 = vsel %vm354, 1, 0
      %v372 = vsel %vm355, 1, 0
      %vm373 = vcmp.eq.s32.totalorder %v371, 1
      %vm374 = vcmp.eq.s32.totalorder %v372, 1
      %v375 = vsel %vm373, %v370, 0.0
      %v376 = vsel %vm374, %v369, 0.0
      %377 = vst [vmem:[#allocation2] sm:$0xff] %v375
      %378 = vst [vmem:[#allocation2 + $0x8] sm:$0xff] %v376
      %379 = vrot.lane.b32.xlu0 %v362, 16
      %v380 = vpop.permute.xlu0 %379
      %381 = vrot.lane.b32.xlu0 %v363, 16
      %v382 = vpop.permute.xlu0 %381
      %vm383 = vcmp.lt.s32.totalorder %v340, 16
      %v384 = vsel %vm383, %v380, %v382
      %v385 = vsel %vm383, %v382, %v380
      %v386 = vsel %vm350, 1, 0
      %v387 = vsel %vm351, 1, 0
      %vm388 = vcmp.eq.s32.totalorder %v386, 1
      %vm389 = vcmp.eq.s32.totalorder %v387, 1
      %v390 = vsel %vm388, %v385, 0.0
      %v391 = vsel %vm389, %v384, 0.0
      %392 = vst [vmem:[#allocation2 + $0x10] sm:$0xff] %v390
      %393 = vst [vmem:[#allocation2 + $0x18] sm:$0xff] %v391
      %394 = vrot.lane.b32.xlu0 %v362, 15
      %v395 = vpop.permute.xlu0 %394
      %396 = vrot.lane.b32.xlu0 %v363, 15
      %v397 = vpop.permute.xlu0 %396
      %vm398 = vcmp.lt.s32.totalorder %v340, 15
      %v399 = vsel %vm398, %v395, %v397
      %v400 = vsel %vm398, %v397, %v395
      %v401 = vsel %vm356, 1, 0
      %v402 = vsel %vm357, 1, 0
      %vm403 = vcmp.eq.s32.totalorder %v401, 1
      %vm404 = vcmp.eq.s32.totalorder %v402, 1
      %v405 = vsel %vm403, %v400, 0.0
      %v406 = vsel %vm404, %v399, 0.0
      %407 = vst [vmem:[#allocation2 + $0x20] sm:$0xff] %v405
      %408 = vst [vmem:[#allocation2 + $0x28] sm:$0xff] %v406
      %409 = vrot.lane.b32.xlu0 %v362, 1
      %v410 = vpop.permute.xlu0 %409
      %411 = vrot.lane.b32.xlu0 %v363, 1
      %v412 = vpop.permute.xlu0 %411
      %vm413 = vcmp.lt.s32.totalorder %v340, 1
      %v414 = vsel %vm413, %v410, %v412
      %v415 = vsel %vm413, %v412, %v410
      %v416 = vsel %vm346, 1, 0
      %v417 = vsel %vm347, 1, 0
      %vm418 = vcmp.eq.s32.totalorder %v416, 1
      %vm419 = vcmp.eq.s32.totalorder %v417, 1
      %v420 = vsel %vm418, %v415, 0.0
      %v421 = vsel %vm419, %v414, 0.0
      %422 = vst [vmem:[#allocation2 + $0x30] sm:$0xff] %v420
      %423 = vst [vmem:[#allocation2 + $0x38] sm:$0xff] %v421
      %424 = vst [vmem:[#allocation2 + $0x40] sm:$0xff] %v362
      %425 = vst [vmem:[#allocation2 + $0x48] sm:$0xff] %v363
      %426 = vrot.lane.b32.xlu0 %v362, 127
      %v427 = vpop.permute.xlu0 %426
      %428 = vrot.lane.b32.xlu0 %v363, 127
      %v429 = vpop.permute.xlu0 %428
      %vm430 = vcmp.lt.s32.totalorder %v340, 127
      %v431 = vsel %vm430, %v427, %v429
      %v432 = vsel %vm430, %v429, %v427
      %v433 = vsel %vm348, 1, 0
      %v434 = vsel %vm349, 1, 0
      %vm435 = vcmp.eq.s32.totalorder %v433, 1
      %vm436 = vcmp.eq.s32.totalorder %v434, 1
      %v437 = vsel %vm435, %v431, 0.0
      %v438 = vsel %vm436, %v432, 0.0
      %439 = vst [vmem:[#allocation2 + $0x50] sm:$0xff] %v437
      %440 = vst [vmem:[#allocation2 + $0x58] sm:$0xff] %v438
      %441 = vrot.lane.b32.xlu0 %v362, 113
      %v442 = vpop.permute.xlu0 %441
      %443 = vrot.lane.b32.xlu0 %v363, 113
      %v444 = vpop.permute.xlu0 %443
      %vm445 = vcmp.lt.s32.totalorder %v340, 113
      %v446 = vsel %vm445, %v442, %v444
      %v447 = vsel %vm445, %v444, %v442
      %v448 = vsel %vm358, 1, 0
      %v449 = vsel %vm359, 1, 0
      %vm450 = vcmp.eq.s32.totalorder %v448, 1
      %vm451 = vcmp.eq.s32.totalorder %v449, 1
      %v452 = vsel %vm450, %v446, 0.0
      %v453 = vsel %vm451, %v447, 0.0
      %454 = vst [vmem:[#allocation2 + $0x60] sm:$0xff] %v452
      %455 = vst [vmem:[#allocation2 + $0x68] sm:$0xff] %v453
      %456 = vrot.lane.b32.xlu0 %v362, 112
      %v457 = vpop.permute.xlu0 %456
      %458 = vrot.lane.b32.xlu0 %v363, 112
      %v459 = vpop.permute.xlu0 %458
      %vm460 = vcmp.lt.s32.totalorder %v340, 112
      %v461 = vsel %vm460, %v457, %v459
      %v462 = vsel %vm460, %v459, %v457
      %v463 = vsel %vm352, 1, 0
      %v464 = vsel %vm353, 1, 0
      %vm465 = vcmp.eq.s32.totalorder %v463, 1
      %vm466 = vcmp.eq.s32.totalorder %v464, 1
      %v467 = vsel %vm465, %v461, 0.0
      %v468 = vsel %vm466, %v462, 0.0
      %469 = vst [vmem:[#allocation2 + $0x70] sm:$0xff] %v467
      %470 = vst [vmem:[#allocation2 + $0x78] sm:$0xff] %v468
      %471 = vrot.lane.b32.xlu0 %v362, 111
      %v472 = vpop.permute.xlu0 %471
      %473 = vrot.lane.b32.xlu0 %v363, 111
      %v474 = vpop.permute.xlu0 %473
      %vm475 = vcmp.lt.s32.totalorder %v340, 111
      %v476 = vsel %vm475, %v472, %v474
      %v477 = vsel %vm475, %v474, %v472
      %v478 = vsel %vm360, 1, 0
      %v479 = vsel %vm361, 1, 0
      %vm480 = vcmp.eq.s32.totalorder %v478, 1
      %vm481 = vcmp.eq.s32.totalorder %v479, 1
      %v482 = vsel %vm480, %v476, 0.0
      %v483 = vsel %vm481, %v477, 0.0
      %484 = vst [vmem:[#allocation2 + $0x80] sm:$0xff] %v482
      %485 = vst [vmem:[#allocation2 + $0x88] sm:$0xff] %v483
      %v486 = vld [vmem:[%s1] sm:$0xff]
      %v487 = vld [vmem:[%s1 + $0x8] sm:$0xff]
      %v488 = vld [vmem:[%s1 + $0x10] sm:$0xff]
      %v489 = vld [vmem:[%s1 + $0x18] sm:$0xff]
      %v490 = vld [vmem:[#allocation2] sm:$0xff]
      %v491 = vld [vmem:[#allocation2 + $0x8] sm:$0xff]
      %v492 = vld [vmem:[#allocation2 + $0x10] sm:$0xff]
      %v493 = vld [vmem:[#allocation2 + $0x18] sm:$0xff]
      %v494 = vld [vmem:[#allocation2 + $0x20] sm:$0xff]
      %v495 = vld [vmem:[#allocation2 + $0x28] sm:$0xff]
      %v496 = vld [vmem:[#allocation2 + $0x30] sm:$0xff]
      %v497 = vld [vmem:[#allocation2 + $0x38] sm:$0xff]
      %v498 = vld [vmem:[#allocation2 + $0x40] sm:$0xff]
      %v499 = vld [vmem:[#allocation2 + $0x48] sm:$0xff]
      %v500 = vld [vmem:[#allocation2 + $0x50] sm:$0xff]
      %v501 = vld [vmem:[#allocation2 + $0x58] sm:$0xff]
      %v502 = vld [vmem:[#allocation2 + $0x60] sm:$0xff]
      %v503 = vld [vmem:[#allocation2 + $0x68] sm:$0xff]
      %v504 = vld [vmem:[#allocation2 + $0x70] sm:$0xff]
      %v505 = vld [vmem:[#allocation2 + $0x78] sm:$0xff]
      %v506 = vld [vmem:[#allocation2 + $0x80] sm:$0xff]
      %v507 = vld [vmem:[#allocation2 + $0x88] sm:$0xff]
      %v508 = vld [vmem:[%s2] sm:$0xff]
      %v509 = vld [vmem:[%s2 + $0x8] sm:$0xff]
      %v510 = vld [vmem:[%s2 + $0x10] sm:$0xff]
      %v511 = vld [vmem:[%s2 + $0x18] sm:$0xff]
      %513 = vset.pattern.permute.xlu0 0
      %514 = vperm.xlu0 %513, %v508
      %v515 = vpop.permute.xlu0 %514
      %518 = vset.pattern.permute.xlu0 0
      %519 = vperm.xlu0 %518, %v509
      %v520 = vpop.permute.xlu0 %519
      %523 = vset.pattern.permute.xlu0 0
      %524 = vperm.xlu0 %523, %v510
      %v525 = vpop.permute.xlu0 %524
      %528 = vset.pattern.permute.xlu0 0
      %529 = vperm.xlu0 %528, %v511
      %v530 = vpop.permute.xlu0 %529
      %vm532 = vcmask 588800
      %v534 = vsel %vm532, %v486, 0
      %v537 = vsel %vm532, %v487, 0
      %v540 = vsel %vm532, %v488, 0
      %v543 = vsel %vm532, %v489, 0
      %545 = vmatprep.subr.mxu0 %v491
      %546 = vmatpush1.msra.mxu0 %v490
      %547 = vmatprep.subr.mxu0 %v493
      %548 = vmatpush1.msra.mxu0 %v492
      %549 = vmatprep.subr.mxu0 %v495
      %550 = vmatpush1.msra.mxu0 %v494
      %551 = vmatprep.subr.mxu0 %v497
      %552 = vmatpush1.msra.mxu0 %v496
      %553 = vmatprep.subr.mxu0 %v499
      %554 = vmatpush1.msra.mxu0 %v498
      %555 = vmatprep.subr.mxu0 %v501
      %556 = vmatpush1.msra.mxu0 %v500
      %557 = vmatprep.subr.mxu0 %v503
      %558 = vmatpush1.msra.mxu0 %v502
      %559 = vmatprep.subr.mxu0 %v505
      %560 = vmatpush1.msra.mxu0 %v504
      %561 = vmatprep.subr.mxu0 %v507
      %562 = vmatpush1.msra.mxu0 %v506
      %563 = vmatprep.subr.mxu0 0.0
      %564 = vmatpush1.msra.mxu0 0.0
      %565 = vmatprep.subr.mxu0 0.0
      %566 = vmatpush1.msra.mxu0 0.0
      %567 = vmatprep.subr.mxu0 0.0
      %568 = vmatpush1.msra.mxu0 0.0
      %569 = vmatprep.subr.mxu0 0.0
      %570 = vmatpush1.msra.mxu0 0.0
      %571 = vmatprep.subr.mxu0 0.0
      %572 = vmatpush1.msra.mxu0 0.0
      %573 = vmatprep.subr.mxu0 0.0
      %574 = vmatpush1.msra.mxu0 0.0
      %575 = vmatprep.subr.mxu0 0.0
      %576 = vmatpush1.msra.mxu0 0.0
      %577 = vmatprep.subr.mxu0 0.0
      %578 = vmatpush1.msra.mxu0 0.0
      %579 = vmatprep.subr.mxu0 0.0
      %580 = vmatpush1.msra.mxu0 0.0
      %581 = vmatprep.subr.mxu0 0.0
      %582 = vmatpush1.msra.mxu0 0.0
      %583 = vmatprep.subr.mxu0 0.0
      %584 = vmatpush1.msra.mxu0 0.0
      %585 = vmatprep.subr.mxu0 0.0
      %586 = vmatpush1.msra.mxu0 0.0
      %587 = vmatprep.subr.mxu0 0.0
      %588 = vmatpush1.msra.mxu0 0.0
      %589 = vmatprep.subr.mxu0 0.0
      %590 = vmatpush1.msra.mxu0 0.0
      %591 = vmatprep.subr.mxu0 0.0
      %592 = vmatpush1.msra.mxu0 0.0
      %593 = vmatprep.subr.mxu0 0.0
      %594 = vmatpush1.msra.mxu0 0.0
      %595 = vmatprep.subr.mxu0 0.0
      %596 = vmatpush1.msra.mxu0 0.0
      %597 = vmatprep.subr.mxu0 0.0
      %598 = vmatpush1.msra.mxu0 0.0
      %599 = vmatprep.subr.mxu0 0.0
      %600 = vmatpush1.msra.mxu0 0.0
      %601 = vmatprep.subr.mxu0 0.0
      %602 = vmatpush1.msra.mxu0 0.0
      %603 = vmatprep.subr.mxu0 0.0
      %604 = vmatpush1.msra.mxu0 0.0
      %605 = vmatprep.subr.mxu0 0.0
      %606 = vmatpush1.msra.mxu0 0.0
      %607 = vmatprep.subr.mxu0 0.0
      %608 = vmatpush1.msra.mxu0 0.0
      %609 = vmatprep.mubr.f32.mxu0 0.0
      %610 = vmatmul.mubr.f32.gmra.mrb[0].mxu0 %v534
      %v611 = vpop.f32.mrb[0].mxu0
      %v612 = vadd.f32 %v515, %v611
      %v613 = vpop.f32.mrb[0].mxu0
      %v614 = vadd.f32 %v515, %v613
      %615 = vmatprep.mubr.f32.mxu0 0.0
      %616 = vmatmul.mubr.f32.gmra.mrb[0].mxu0 %v537
      %v617 = vpop.f32.mrb[0].mxu0
      %v618 = vadd.f32 %v520, %v617
      %v619 = vpop.f32.mrb[0].mxu0
      %v620 = vadd.f32 %v520, %v619
      %621 = vmatprep.mubr.f32.mxu0 0.0
      %622 = vmatmul.mubr.f32.gmra.mrb[0].mxu0 %v540
      %v623 = vpop.f32.mrb[0].mxu0
      %v624 = vadd.f32 %v525, %v623
      %v625 = vpop.f32.mrb[0].mxu0
      %v626 = vadd.f32 %v525, %v625
      %627 = vmatprep.mubr.f32.mxu0 0.0
      %628 = vmatmul.mubr.f32.gmra.mrb[0].mxu0 %v543
      %v629 = vpop.f32.mrb[0].mxu0
      %v630 = vadd.f32 %v530, %v629
      %v631 = vpop.f32.mrb[0].mxu0
      %v632 = vadd.f32 %v530, %v631
      %633 = vdwg.mxu0
      %vm634 = vcmp.gt.f32.partialorder %v612, 0.0
      %vm635 = vcmp.gt.f32.partialorder %v614, 0.0
      %vm636 = vcmp.gt.f32.partialorder %v618, 0.0
      %vm637 = vcmp.gt.f32.partialorder %v620, 0.0
      %vm638 = vcmp.gt.f32.partialorder %v624, 0.0
      %vm639 = vcmp.gt.f32.partialorder %v626, 0.0
      %vm640 = vcmp.gt.f32.partialorder %v630, 0.0
      %vm641 = vcmp.gt.f32.partialorder %v632, 0.0
      %v642 = vmin.f32 %v612, 0.0
      %v643 = vmin.f32 %v614, 0.0
      %v644 = vmin.f32 %v618, 0.0
      %v645 = vmin.f32 %v620, 0.0
      %v646 = vmin.f32 %v624, 0.0
      %v647 = vmin.f32 %v626, 0.0
      %v648 = vmin.f32 %v630, 0.0
      %v649 = vmin.f32 %v632, 0.0
      %v650 = vmul.f32 %v642, 1.442695
      %v651 = vpow.pop %v650
      %v652 = vmul.f32 %v643, 1.442695
      %v653 = vpow.pop %v652
      %v654 = vmul.f32 %v644, 1.442695
      %v655 = vpow.pop %v654
      %v656 = vmul.f32 %v645, 1.442695
      %v657 = vpow.pop %v656
      %v658 = vmul.f32 %v646, 1.442695
      %v659 = vpow.pop %v658
      %v660 = vmul.f32 %v647, 1.442695
      %v661 = vpow.pop %v660
      %v662 = vmul.f32 %v648, 1.442695
      %v663 = vpow.pop %v662
      %v664 = vmul.f32 %v649, 1.442695
      %v665 = vpow.pop %v664
      %v666 = vsub.f32 %v651, 1.0
      %v667 = vsub.f32 %v653, 1.0
      %v668 = vsub.f32 %v655, 1.0
      %v669 = vsub.f32 %v657, 1.0
      %v670 = vsub.f32 %v659, 1.0
      %v671 = vsub.f32 %v661, 1.0
      %v672 = vsub.f32 %v663, 1.0
      %v673 = vsub.f32 %v665, 1.0
      %v674 = vsel %vm634, %v612, %v666
      %v675 = vsel %vm635, %v614, %v667
      %v676 = vsel %vm636, %v618, %v668
      %v677 = vsel %vm637, %v620, %v669
      %v678 = vsel %vm638, %v624, %v670
      %v679 = vsel %vm639, %v626, %v671
      %v680 = vsel %vm640, %v630, %v672
      %v681 = vsel %vm641, %v632, %v673
      %v682 = vld [vmem:[%s3] sm:$0xff]
      %v683 = vld [vmem:[%s3 + $0x8] sm:$0xff]
      %v684 = vld [vmem:[%s3 + $0x10] sm:$0xff]
      %v685 = vld [vmem:[%s3 + $0x18] sm:$0xff]
      %v686 = vld [vmem:[%s4] sm:$0xff]
      %v687 = vld [vmem:[%s4 + $0x8] sm:$0xff]
      %v688 = vld [vmem:[%s4 + $0x10] sm:$0xff]
      %v689 = vld [vmem:[%s4 + $0x18] sm:$0xff]
      %691 = vset.pattern.permute.xlu0 0
      %692 = vperm.xlu0 %691, %v686
      %v693 = vpop.permute.xlu0 %692
      %696 = vset.pattern.permute.xlu0 0
      %697 = vperm.xlu0 %696, %v687
      %v698 = vpop.permute.xlu0 %697
      %701 = vset.pattern.permute.xlu0 0
      %702 = vperm.xlu0 %701, %v688
      %v703 = vpop.permute.xlu0 %702
      %706 = vset.pattern.permute.xlu0 0
      %707 = vperm.xlu0 %706, %v689
      %v708 = vpop.permute.xlu0 %707
      %vm710 = vcmask 261120
      %v712 = vsel %vm710, %v682, 0
      %v715 = vsel %vm710, %v683, 0
      %v718 = vsel %vm710, %v684, 0
      %v721 = vsel %vm710, %v685, 0
      %723 = vmatprep.subr.mxu0 %v675
      %724 = vmatpush1.msra.mxu0 %v674
      %725 = vmatprep.subr.mxu0 %v677
      %726 = vmatpush1.msra.mxu0 %v676
      %727 = vmatprep.subr.mxu0 %v679
      %728 = vmatpush1.msra.mxu0 %v678
      %729 = vmatprep.subr.mxu0 %v681
      %730 = vmatpush1.msra.mxu0 %v680
      %731 = vmatprep.subr.mxu0 0.0
      %732 = vmatpush1.msra.mxu0 0.0
      %733 = vmatprep.subr.mxu0 0.0
      %734 = vmatpush1.msra.mxu0 0.0
      %735 = vmatprep.subr.mxu0 0.0
      %736 = vmatpush1.msra.mxu0 0.0
      %737 = vmatprep.subr.mxu0 0.0
      %738 = vmatpush1.msra.mxu0 0.0
      %739 = vmatprep.subr.mxu0 0.0
      %740 = vmatpush1.msra.mxu0 0.0
      %741 = vmatprep.subr.mxu0 0.0
      %742 = vmatpush1.msra.mxu0 0.0
      %743 = vmatprep.subr.mxu0 0.0
      %744 = vmatpush1.msra.mxu0 0.0
      %745 = vmatprep.subr.mxu0 0.0
      %746 = vmatpush1.msra.mxu0 0.0
      %747 = vmatprep.subr.mxu0 0.0
      %748 = vmatpush1.msra.mxu0 0.0
      %749 = vmatprep.subr.mxu0 0.0
      %750 = vmatpush1.msra.mxu0 0.0
      %751 = vmatprep.subr.mxu0 0.0
      %752 = vmatpush1.msra.mxu0 0.0
      %753 = vmatprep.subr.mxu0 0.0
      %754 = vmatpush1.msra.mxu0 0.0
      %755 = vmatprep.subr.mxu0 0.0
      %756 = vmatpush1.msra.mxu0 0.0
      %757 = vmatprep.subr.mxu0 0.0
      %758 = vmatpush1.msra.mxu0 0.0
      %759 = vmatprep.subr.mxu0 0.0
      %760 = vmatpush1.msra.mxu0 0.0
      %761 = vmatprep.subr.mxu0 0.0
      %762 = vmatpush1.msra.mxu0 0.0
      %763 = vmatprep.subr.mxu0 0.0
      %764 = vmatpush1.msra.mxu0 0.0
      %765 = vmatprep.subr.mxu0 0.0
      %766 = vmatpush1.msra.mxu0 0.0
      %767 = vmatprep.subr.mxu0 0.0
      %768 = vmatpush1.msra.mxu0 0.0
      %769 = vmatprep.subr.mxu0 0.0
      %770 = vmatpush1.msra.mxu0 0.0
      %771 = vmatprep.subr.mxu0 0.0
      %772 = vmatpush1.msra.mxu0 0.0
      %773 = vmatprep.subr.mxu0 0.0
      %774 = vmatpush1.msra.mxu0 0.0
      %775 = vmatprep.subr.mxu0 0.0
      %776 = vmatpush1.msra.mxu0 0.0
      %777 = vmatprep.subr.mxu0 0.0
      %778 = vmatpush1.msra.mxu0 0.0
      %779 = vmatprep.subr.mxu0 0.0
      %780 = vmatpush1.msra.mxu0 0.0
      %781 = vmatprep.subr.mxu0 0.0
      %782 = vmatpush1.msra.mxu0 0.0
      %783 = vmatprep.subr.mxu0 0.0
      %784 = vmatpush1.msra.mxu0 0.0
      %785 = vmatprep.subr.mxu0 0.0
      %786 = vmatpush1.msra.mxu0 0.0
      %787 = vmatprep.mubr.f32.mxu0 0.0
      %788 = vmatmul.mubr.f32.gmra.mrb[0].mxu0 %v712
      %v789 = vpop.f32.mrb[0].mxu0
      %v790 = vadd.f32 %v693, %v789
      %v791 = vpop.f32.mrb[0].mxu0
      %v792 = vadd.f32 %v693, %v791
      %793 = vmatprep.mubr.f32.mxu0 0.0
      %794 = vmatmul.mubr.f32.gmra.mrb[0].mxu0 %v715
      %v795 = vpop.f32.mrb[0].mxu0
      %v796 = vadd.f32 %v698, %v795
      %v797 = vpop.f32.mrb[0].mxu0
      %v798 = vadd.f32 %v698, %v797
      %799 = vmatprep.mubr.f32.mxu0 0.0
      %800 = vmatmul.mubr.f32.gmra.mrb[0].mxu0 %v718
      %v801 = vpop.f32.mrb[0].mxu0
      %v802 = vadd.f32 %v703, %v801
      %v803 = vpop.f32.mrb[0].mxu0
      %v804 = vadd.f32 %v703, %v803
      %805 = vmatprep.mubr.f32.mxu0 0.0
      %806 = vmatmul.mubr.f32.gmra.mrb[0].mxu0 %v721
      %v807 = vpop.f32.mrb[0].mxu0
      %v808 = vadd.f32 %v708, %v807
      %v809 = vpop.f32.mrb[0].mxu0
      %v810 = vadd.f32 %v708, %v809
      %811 = vdwg.mxu0
      %v814 = vcombine.low %v790, %v792
      %v816 = vunpack.c.l.s4 1966171168
      %v817 = vunpack.c.0.s8 %v816
      %v818 = vlaneseq
      %v819 = vshrl.u32 %v818, 7
      %v820 = vsub.s32 %v817, %v819
      %v821 = vrot.slane %v814, %v820
      %v823 = vunpack.c.l.s4 1966171168
      %v824 = vunpack.c.0.s8 %v823
      %v825 = vlaneseq
      %v826 = vshrl.u32 %v825, 7
      %v827 = vsub.s32 %v824, %v826
      %v828 = vrot.slane %v821, %v827
      %v830 = vlaneseq
      %vm831 = vcmp.ge.s32.totalorder %v830, 0
      %vm832 = vcmp.lt.s32.totalorder %v830, 256
      %vm833 = vmand %vm831, %vm832
      %834 = vst.msk [vmem:[%s324] sm:$0x3] %vm833, %v828
      %v837 = vcombine.low %v796, %v798
      %839 = vst [vmem:[%s329] sm:$0xff] %v837
      %v842 = vcombine.low %v802, %v804
      %844 = vst [vmem:[%s334] sm:$0xff] %v842
      %v847 = vcombine.low %v808, %v810
      %v849 = vunpack.c.l.s4 1966171168
      %v850 = vunpack.c.0.s8 %v849
      %v851 = vlaneseq
      %v852 = vshrl.u32 %v851, 7
      %v853 = vsub.s32 %v850, %v852
      %v854 = vrot.slane %v847, %v853
      %v856 = vunpack.c.l.s4 1966171168
      %v857 = vunpack.c.0.s8 %v856
      %v858 = vlaneseq
      %v859 = vshrl.u32 %v858, 7
      %v860 = vsub.s32 %v857, %v859
      %v861 = vrot.slane %v854, %v860
      %863 = vst.msk [vmem:[%s338] sm:$0x3] %vm833, %v861
      %p864 = scmp.lt.s32.totalorder %s20, 1
      %s865 = scalar_select %p864, %s20, 1
      %s866 = smul.addr %s865, 2
      %s867 = scalar_lea.vmem %s5, %s866
      %p868 = scmp.lt.s32.totalorder %s20, 1
      %s869 = scalar_select %p868, %s20, 1
      %s870 = smul.addr %s869, 2
      %s871 = smul.addr %s870, 4
      %s872 = scalar_lea.vmem %s6, %s871
      %p873 = scmp.lt.s32.totalorder %s20, 1
      %s874 = scalar_select %p873, %s20, 1
      %s875 = smul.addr %s874, 2
      %s876 = smul.addr %s875, 4
      %s877 = scalar_lea.vmem %s7, %s876
      %p878 = scmp.lt.s32.totalorder %s20, 1
      %s879 = scalar_select %p878, %s20, 1
      %s880 = smul.addr %s879, 2
      %s881 = scalar_lea.vmem %s8, %s880
      // Predicated region
      $region41: #{outnet_forward.1} parent=39 // pred_check
        %p882 = pneg %p148
      $region42: #{outnet_forward.1} parent=39 // pred_check_branch
        %884 = sbr.rel (%p882) target = $region44
      $region43: #{outnet_forward.1} parent=39 // pred_region
        _
      $region44: #{outnet_forward.1} parent=39 // pred_fallthru
        _
      // Predicated region
      $region45: #{outnet_forward.1} parent=39 // pred_check
        %p885 = pneg %p174
      $region46: #{outnet_forward.1} parent=39 // pred_check_branch
        %887 = sbr.rel (%p885) target = $region48
      $region47: #{outnet_forward.1} parent=39 // pred_region
        _
      $region48: #{outnet_forward.1} parent=39 // pred_fallthru
        _
      // Predicated region
      $region49: #{outnet_forward.1} parent=39 // pred_check
        %p888 = pneg %p200
      $region50: #{outnet_forward.1} parent=39 // pred_check_branch
        %890 = sbr.rel (%p888) target = $region52
      $region51: #{outnet_forward.1} parent=39 // pred_region
        _
      $region52: #{outnet_forward.1} parent=39 // pred_fallthru
        _
      // Predicated region
      $region53: #{outnet_forward.1} parent=39 // pred_check
        %p891 = pneg %p226
      $region54: #{outnet_forward.1} parent=39 // pred_check_branch
        %893 = sbr.rel (%p891) target = $region56
      $region55: #{outnet_forward.1} parent=39 // pred_region
        _
      $region56: #{outnet_forward.1} parent=39 // pred_fallthru
        _
    $region40: #{outnet_forward.1} parent=5 // pred_fallthru
      _
    %p894 = scmp.le.s32.totalorder 2, %s15
    // Predicated region
    $region57: #{outnet_forward.1} parent=5 // pred_check
      %p895 = pneg %p894
    $region58: #{outnet_forward.1} parent=5 // pred_check_branch
      %897 = sbr.rel (%p895) target = $region60
    $region59: #{outnet_forward.1} parent=5 // pred_region
      %s898 = ssub.s32 %s15, 2
      // Predicated region
      $region61: #{outnet_forward.1} parent=59 // pred_check
        %p899 = pneg %p154
      $region62: #{outnet_forward.1} parent=59 // pred_check_branch
        %901 = sbr.rel (%p899) target = $region64
      $region63: #{outnet_forward.1} parent=59 // pred_region
        %p902 = scmp.lt.s32.totalorder %s21, 1
        %s903 = scalar_select %p902, %s21, 1
        %s904 = smul.addr %s903, 2
        %s905 = scalar_lea.vmem %s5, %s904
      $region64: #{outnet_forward.1} parent=59 // pred_fallthru
        _
      // Predicated region
      $region65: #{outnet_forward.1} parent=59 // pred_check
        %p906 = pneg %p180
      $region66: #{outnet_forward.1} parent=59 // pred_check_branch
        %908 = sbr.rel (%p906) target = $region68
      $region67: #{outnet_forward.1} parent=59 // pred_region
        %p909 = scmp.lt.s32.totalorder %s21, 1
        %s910 = scalar_select %p909, %s21, 1
        %s911 = smul.addr %s910, 2
        %s912 = smul.addr %s911, 4
        %s913 = scalar_lea.vmem %s6, %s912
      $region68: #{outnet_forward.1} parent=59 // pred_fallthru
        _
      // Predicated region
      $region69: #{outnet_forward.1} parent=59 // pred_check
        %p914 = pneg %p206
      $region70: #{outnet_forward.1} parent=59 // pred_check_branch
        %916 = sbr.rel (%p914) target = $region72
      $region71: #{outnet_forward.1} parent=59 // pred_region
        %p917 = scmp.lt.s32.totalorder %s21, 1
        %s918 = scalar_select %p917, %s21, 1
        %s919 = smul.addr %s918, 2
        %s920 = smul.addr %s919, 4
        %s921 = scalar_lea.vmem %s7, %s920
      $region72: #{outnet_forward.1} parent=59 // pred_fallthru
        _
      // Predicated region
      $region73: #{outnet_forward.1} parent=59 // pred_check
        %p922 = pneg %p232
      $region74: #{outnet_forward.1} parent=59 // pred_check_branch
        %924 = sbr.rel (%p922) target = $region76
      $region75: #{outnet_forward.1} parent=59 // pred_region
        %p925 = scmp.lt.s32.totalorder %s21, 1
        %s926 = scalar_select %p925, %s21, 1
        %s927 = smul.addr %s926, 2
        %s928 = scalar_lea.vmem %s8, %s927
      $region76: #{outnet_forward.1} parent=59 // pred_fallthru
        _
    $region60: #{outnet_forward.1} parent=5 // pred_fallthru
      _
  $region6: #{outnet_forward.1} parent=0 // loop_footer
    %s19 = sadd.s32 1, %s15
  $region7: #{outnet_forward.1} parent=0 // loop_footer_branch
    %14 = sbr.rel target = $region3
  $region8: #{outnet_forward.1} parent=0 // loop_exit
    _

</llo_original>
